<compile_context>
chip_gen: v7x
topology: tpu7x:2x2x1
jax: 0.10.0
libtpu: 0.0.40
codegen_flags: <defaults>
</compile_context>

<pallas_src>
import jax
import jax.numpy as jnp
from jax.experimental import pallas as pl
from jax.experimental.pallas import tpu as pltpu

IN_DIM = 12 * 8 * 8 + 4 + 8 + 1   # 781
IN_PAD = 896                      # 7 * 128, lane-aligned contraction dim
DIMS = [IN_DIM, 256, 128, 64, 32, 1]


def _cdiv(a, b):
    return (a + b - 1) // b


def _round_up(x, m):
    return _cdiv(x, m) * m


def _choose_batch_tile(B, tb_max=1024):
    """Pick the batch tile TB.

    * B <= 256: one block covering the whole batch (block dim == array dim is
      always layout-legal; zero padded rows).
    * B  > 256: >=2 grid steps (engages both TensorCores on v7x), ~tb_max rows
      per step, rounded to the 16-row bf16 sublane granule to keep batch
      padding waste minimal.  (On v5e a 128-multiple would fill MXU passes
      slightly better, but padded rows are pure waste in the HBM-bound
      regime on v6e/v7x, so we bias toward minimal padding.)
    """
    if B <= 256:
        return B
    n_steps = max(2, _cdiv(B, tb_max))
    return _round_up(_cdiv(B, n_steps), 16)


def chess_mlp_kernel(x_ref,
                     w1_ref, b1_ref,
                     w2_ref, b2_ref,
                     w3_ref, b3_ref,
                     w4_ref, b4_ref,
                     w5_ref, b5_ref,
                     o_ref, xpad_ref):
    """(linear + relu) x 4 on the MXU (bf16 in, f32 acc), final 32->1 on the VPU."""
    tb = x_ref.shape[0]

    # Lane-align the 781-wide rows inside VMEM: bf16 cast into lanes [0, 781),
    # explicit zeros in the 115 pad lanes.  Re-written every step (no
    # program_id==0 gating) so it is correct when the grid is split across
    # TensorCores ("parallel" batch axis).
    xpad_ref[:, :IN_DIM] = x_ref[...].astype(jnp.bfloat16)
    xpad_ref[:, IN_DIM:] = jnp.zeros((tb, IN_PAD - IN_DIM), jnp.bfloat16)

    h = jnp.dot(xpad_ref[...], w1_ref[...],
                preferred_element_type=jnp.float32) + b1_ref[...]        # (TB, 256)
    h = jnp.maximum(h, 0.0).astype(jnp.bfloat16)

    h = jnp.dot(h, w2_ref[...], preferred_element_type=jnp.float32) + b2_ref[...]
    h = jnp.maximum(h, 0.0).astype(jnp.bfloat16)                         # (TB, 128)

    h = jnp.dot(h, w3_ref[...], preferred_element_type=jnp.float32) + b3_ref[...]
    h = jnp.maximum(h, 0.0).astype(jnp.bfloat16)                         # (TB, 64)

    h = jnp.dot(h, w4_ref[...], preferred_element_type=jnp.float32) + b4_ref[...]
    h = jnp.maximum(h, 0.0)                                              # (TB, 32) f32

    # Final 32 -> 1: elementwise multiply by the w5 row + cross-lane sum
    # (VPU/XLU), keeps the 1-lane-wide tail off the MXU.
    out = jnp.sum(h * w5_ref[...], axis=-1, keepdims=True) + b5_ref[...]  # (TB, 1)
    o_ref[...] = out.astype(o_ref.dtype)


def prepare_params(params):
    """One-time weight prep (hoisted out of the per-call forward).

    Returns bf16 weights (W1 zero-padded to 896 input rows so the layer-1
    contraction is lane-aligned), f32 biases, and the (1, 32) w5 row used by
    the VPU tail.
    """
    (w1, b1), (w2, b2), (w3, b3), (w4, b4), (w5, b5) = params
    w1p = jnp.zeros((IN_PAD, DIMS[1]), jnp.bfloat16).at[:IN_DIM, :].set(
        w1.astype(jnp.bfloat16))
    return (w1p, b1.astype(jnp.float32),
            w2.astype(jnp.bfloat16), b2.astype(jnp.float32),
            w3.astype(jnp.bfloat16), b3.astype(jnp.float32),
            w4.astype(jnp.bfloat16), b4.astype(jnp.float32),
            w5.reshape(1, DIMS[4]).astype(jnp.float32),
            b5.reshape(1, 1).astype(jnp.float32))


@jax.jit
def chess_model_forward(x, prepared):
    """x: (B, 781) f32 (or bf16); prepared: output of prepare_params()."""
    B = x.shape[0]
    w1p, b1, w2b, b2, w3b, b3, w4b, b4, w5r, b5 = prepared

    tb = _choose_batch_tile(B)
    grid = _cdiv(B, tb)

    const = lambda i: (0, 0)   # weights/biases stay VMEM-resident across steps
    in_specs = [
        pl.BlockSpec((tb, IN_DIM), lambda i: (i, 0)),   # x streamed as-is from HBM
        pl.BlockSpec(w1p.shape, const), pl.BlockSpec(b1.shape, const),
        pl.BlockSpec(w2b.shape, const), pl.BlockSpec(b2.shape, const),
        pl.BlockSpec(w3b.shape, const), pl.BlockSpec(b3.shape, const),
        pl.BlockSpec(w4b.shape, const), pl.BlockSpec(b4.shape, const),
        pl.BlockSpec(w5r.shape, const), pl.BlockSpec(b5.shape, const),
    ]

    return pl.pallas_call(
        chess_mlp_kernel,
        out_shape=jax.ShapeDtypeStruct((B, 1), jnp.float32),
        grid=(grid,),
        in_specs=in_specs,
        out_specs=pl.BlockSpec((tb, 1), lambda i: (i, 0)),
        scratch_shapes=[pltpu.VMEM((tb, IN_PAD), jnp.bfloat16)],
        compiler_params=pltpu.CompilerParams(
            dimension_semantics=("parallel",),   # 2 TCs on v7x; harmless elsewhere
            vmem_limit_bytes=32 << 20),
    )(x, w1p, b1, w2b, b2, w3b, b3, w4b, b4, w5r, b5)


def init_params(key):
    """Deterministic init matching the PyTorch Linear shapes.

    PyTorch stores weight as (out, in); we store the transpose (in, out)
    so the kernel computes x @ W + b (identical math to x @ weight.T + bias).
    """
    params = []
    for i in range(len(DIMS) - 1):
        fan_in, fan_out = DIMS[i], DIMS[i + 1]
        key, kw, kb = jax.random.split(key, 3)
        bound = fan_in ** -0.5
        w = jax.random.uniform(kw, (fan_in, fan_out), jnp.float32, -bound, bound)
        b = jax.random.uniform(kb, (1, fan_out), jnp.float32, -bound, bound)
        params.append((w, b))
    return params


def reference_forward_f32(x, params):
    """Pure f32 reference — exact ChessModel.forward semantics."""
    h = x
    n = len(params)
    for i, (w, b) in enumerate(params):
        h = h @ w + b
        if i < n - 1:
            h = jnp.maximum(h, 0.0)
    return h


def reference_forward_quant(x, params):
    """Pure-JAX reference with the same bf16 quantization points as the kernel."""
    h = x.astype(jnp.bfloat16).astype(jnp.float32)
    n = len(params)
    for i, (w, b) in enumerate(params):
        if i < n - 1:
            wq = w.astype(jnp.bfloat16).astype(jnp.float32)
            h = jnp.maximum(h @ wq + b, 0.0)
            if i < n - 2:                      # layer-4 output stays f32 in the kernel
                h = h.astype(jnp.bfloat16).astype(jnp.float32)
        else:
            h = h @ w + b                      # final 32->1 in f32
    return h


if __name__ == "__main__":
    key = jax.random.PRNGKey(0)
    key, kx = jax.random.split(key)
    params = init_params(key)
    prepared = prepare_params(params)          # one-time, outside the hot path
    prepared = jax.tree_util.tree_map(jax.block_until_ready, prepared)

    # Small batch: single (8, 781) block, zero padding.
    batch = 8
    x = jax.random.normal(kx, (batch, IN_DIM), jnp.float32)
    out = jax.block_until_ready(chess_model_forward(x, prepared))
    ref_q = reference_forward_quant(x, params)
    ref_f = reference_forward_f32(x, params)
    assert out.shape == (batch, 1), out.shape
    assert jnp.allclose(out, ref_q, atol=2e-2, rtol=2e-2), (out, ref_q)
    # bf16 MXU inputs vs the f32 PyTorch model: loose tolerance (documented).
    assert jnp.allclose(out, ref_f, atol=7e-2, rtol=7e-2), (out, ref_f)

    # Larger batch: exercises the multi-tile grid (TB=160, 2 parallel steps,
    # ragged last block masked by Pallas).
    batch2 = 300
    x2 = jax.random.normal(jax.random.PRNGKey(1), (batch2, IN_DIM), jnp.float32)
    out2 = jax.block_until_ready(chess_model_forward(x2, prepared))
    ref2_q = reference_forward_quant(x2, params)
    assert out2.shape == (batch2, 1), out2.shape
    assert jnp.allclose(out2, ref2_q, atol=2e-2, rtol=2e-2)

    print("KERNEL_OK")
</pallas_src>

<mosaic_0001>
module attributes {stable_mosaic.version = 11 : i64} {
  func.func @chess_mlp_kernel(%arg0: i32, %arg1: memref<8x781xf32, #tpu.memory_space<vmem>>, %arg2: memref<896x256xbf16, #tpu.memory_space<vmem>>, %arg3: memref<1x256xf32, #tpu.memory_space<vmem>>, %arg4: memref<256x128xbf16, #tpu.memory_space<vmem>>, %arg5: memref<1x128xf32, #tpu.memory_space<vmem>>, %arg6: memref<128x64xbf16, #tpu.memory_space<vmem>>, %arg7: memref<1x64xf32, #tpu.memory_space<vmem>>, %arg8: memref<64x32xbf16, #tpu.memory_space<vmem>>, %arg9: memref<1x32xf32, #tpu.memory_space<vmem>>, %arg10: memref<1x32xf32, #tpu.memory_space<vmem>>, %arg11: memref<1x1xf32, #tpu.memory_space<vmem>>, %arg12: memref<8x1xf32, #tpu.memory_space<vmem>>, %arg13: memref<8x896xbf16, #tpu.memory_space<vmem>>) attributes {dimension_semantics = [#tpu.dimension_semantics<parallel>], iteration_bounds = array<i64: 1>, scalar_prefetch = 0 : i64, scratch_operands = 1 : i64, tpu.core_type = #tpu.core_type<tc>, window_params = [{transform_indices = @transform_0, window_bounds = array<i64: 8, 781>}, {pipeline_mode = #tpu.pipeline_mode<synchronous>, transform_indices = @transform_1, window_bounds = array<i64: 896, 256>}, {pipeline_mode = #tpu.pipeline_mode<synchronous>, transform_indices = @transform_2, window_bounds = array<i64: 1, 256>}, {pipeline_mode = #tpu.pipeline_mode<synchronous>, transform_indices = @transform_3, window_bounds = array<i64: 256, 128>}, {pipeline_mode = #tpu.pipeline_mode<synchronous>, transform_indices = @transform_4, window_bounds = array<i64: 1, 128>}, {pipeline_mode = #tpu.pipeline_mode<synchronous>, transform_indices = @transform_5, window_bounds = array<i64: 128, 64>}, {pipeline_mode = #tpu.pipeline_mode<synchronous>, transform_indices = @transform_6, window_bounds = array<i64: 1, 64>}, {pipeline_mode = #tpu.pipeline_mode<synchronous>, transform_indices = @transform_7, window_bounds = array<i64: 64, 32>}, {pipeline_mode = #tpu.pipeline_mode<synchronous>, transform_indices = @transform_8, window_bounds = array<i64: 1, 32>}, {pipeline_mode = #tpu.pipeline_mode<synchronous>, transform_indices = @transform_9, window_bounds = array<i64: 1, 32>}, {pipeline_mode = #tpu.pipeline_mode<synchronous>, transform_indices = @transform_10, window_bounds = array<i64: 1, 1>}, {transform_indices = @transform_11, window_bounds = array<i64: 8, 1>}]} {
    %c0 = arith.constant 0 : index
    %c0_0 = arith.constant 0 : index
    %0 = vector.load %arg1[%c0, %c0_0] : memref<8x781xf32, #tpu.memory_space<vmem>>, vector<8x781xf32>
    %1 = arith.truncf %0 : vector<8x781xf32> to vector<8x781xbf16>
    %c0_1 = arith.constant 0 : index
    %c0_2 = arith.constant 0 : index
    %2 = vector.load %arg13[%c0_1, %c0_2] : memref<8x896xbf16, #tpu.memory_space<vmem>>, vector<8x781xbf16>
    tpu.vector_store %arg13[%c0_1, %c0_2], %1 {strides = array<i32>} : memref<8x896xbf16, #tpu.memory_space<vmem>>, vector<8x781xbf16>,
    %cst = arith.constant 0.000000e+00 : bf16
    %3 = vector.broadcast %cst : bf16 to vector<8x115xbf16>
    %c0_3 = arith.constant 0 : index
    %c781 = arith.constant 781 : index
    %4 = vector.load %arg13[%c0_3, %c781] : memref<8x896xbf16, #tpu.memory_space<vmem>>, vector<8x115xbf16>
    tpu.vector_store %arg13[%c0_3, %c781], %3 {strides = array<i32>} : memref<8x896xbf16, #tpu.memory_space<vmem>>, vector<8x115xbf16>,
    %c0_4 = arith.constant 0 : index
    %c0_5 = arith.constant 0 : index
    %5 = vector.load %arg13[%c0_4, %c0_5] : memref<8x896xbf16, #tpu.memory_space<vmem>>, vector<8x896xbf16>
    %c0_6 = arith.constant 0 : index
    %c0_7 = arith.constant 0 : index
    %6 = vector.load %arg2[%c0_6, %c0_7] : memref<896x256xbf16, #tpu.memory_space<vmem>>, vector<896x256xbf16>
    %cst_8 = arith.constant dense<0.000000e+00> : vector<8x256xf32>
    %7 = tpu.matmul %5, %6, %cst_8 {dimension_numbers = #tpu.dot_dimension_numbers<[1], [0], [0], [1], [0, 0, 1, 1], [], []>} : vector<8x896xbf16>, vector<896x256xbf16>, vector<8x256xf32> -> vector<8x256xf32>
    %c0_9 = arith.constant 0 : index
    %c0_10 = arith.constant 0 : index
    %8 = vector.load %arg3[%c0_9, %c0_10] : memref<1x256xf32, #tpu.memory_space<vmem>>, vector<1x256xf32>
    %9 = vector.broadcast %8 : vector<1x256xf32> to vector<8x256xf32>
    %10 = arith.addf %7, %9 : vector<8x256xf32>
    %cst_11 = arith.constant 0.000000e+00 : f32
    %11 = vector.broadcast %cst_11 : f32 to vector<8x256xf32>
    %12 = arith.maximumf %10, %11 : vector<8x256xf32>
    %13 = arith.truncf %12 : vector<8x256xf32> to vector<8x256xbf16>
    %c0_12 = arith.constant 0 : index
    %c0_13 = arith.constant 0 : index
    %14 = vector.load %arg4[%c0_12, %c0_13] : memref<256x128xbf16, #tpu.memory_space<vmem>>, vector<256x128xbf16>
    %cst_14 = arith.constant dense<0.000000e+00> : vector<8x128xf32>
    %15 = tpu.matmul %13, %14, %cst_14 {dimension_numbers = #tpu.dot_dimension_numbers<[1], [0], [0], [1], [0, 0, 1, 1], [], []>} : vector<8x256xbf16>, vector<256x128xbf16>, vector<8x128xf32> -> vector<8x128xf32>
    %c0_15 = arith.constant 0 : index
    %c0_16 = arith.constant 0 : index
    %16 = vector.load %arg5[%c0_15, %c0_16] : memref<1x128xf32, #tpu.memory_space<vmem>>, vector<1x128xf32>
    %17 = vector.broadcast %16 : vector<1x128xf32> to vector<8x128xf32>
    %18 = arith.addf %15, %17 : vector<8x128xf32>
    %cst_17 = arith.constant 0.000000e+00 : f32
    %19 = vector.broadcast %cst_17 : f32 to vector<8x128xf32>
    %20 = arith.maximumf %18, %19 : vector<8x128xf32>
    %21 = arith.truncf %20 : vector<8x128xf32> to vector<8x128xbf16>
    %c0_18 = arith.constant 0 : index
    %c0_19 = arith.constant 0 : index
    %22 = vector.load %arg6[%c0_18, %c0_19] : memref<128x64xbf16, #tpu.memory_space<vmem>>, vector<128x64xbf16>
    %cst_20 = arith.constant dense<0.000000e+00> : vector<8x64xf32>
    %23 = tpu.matmul %21, %22, %cst_20 {dimension_numbers = #tpu.dot_dimension_numbers<[1], [0], [0], [1], [0, 0, 1, 1], [], []>} : vector<8x128xbf16>, vector<128x64xbf16>, vector<8x64xf32> -> vector<8x64xf32>
    %c0_21 = arith.constant 0 : index
    %c0_22 = arith.constant 0 : index
    %24 = vector.load %arg7[%c0_21, %c0_22] : memref<1x64xf32, #tpu.memory_space<vmem>>, vector<1x64xf32>
    %25 = vector.broadcast %24 : vector<1x64xf32> to vector<8x64xf32>
    %26 = arith.addf %23, %25 : vector<8x64xf32>
    %cst_23 = arith.constant 0.000000e+00 : f32
    %27 = vector.broadcast %cst_23 : f32 to vector<8x64xf32>
    %28 = arith.maximumf %26, %27 : vector<8x64xf32>
    %29 = arith.truncf %28 : vector<8x64xf32> to vector<8x64xbf16>
    %c0_24 = arith.constant 0 : index
    %c0_25 = arith.constant 0 : index
    %30 = vector.load %arg8[%c0_24, %c0_25] : memref<64x32xbf16, #tpu.memory_space<vmem>>, vector<64x32xbf16>
    %cst_26 = arith.constant dense<0.000000e+00> : vector<8x32xf32>
    %31 = tpu.matmul %29, %30, %cst_26 {dimension_numbers = #tpu.dot_dimension_numbers<[1], [0], [0], [1], [0, 0, 1, 1], [], []>} : vector<8x64xbf16>, vector<64x32xbf16>, vector<8x32xf32> -> vector<8x32xf32>
    %c0_27 = arith.constant 0 : index
    %c0_28 = arith.constant 0 : index
    %32 = vector.load %arg9[%c0_27, %c0_28] : memref<1x32xf32, #tpu.memory_space<vmem>>, vector<1x32xf32>
    %33 = vector.broadcast %32 : vector<1x32xf32> to vector<8x32xf32>
    %34 = arith.addf %31, %33 : vector<8x32xf32>
    %cst_29 = arith.constant 0.000000e+00 : f32
    %35 = vector.broadcast %cst_29 : f32 to vector<8x32xf32>
    %36 = arith.maximumf %34, %35 : vector<8x32xf32>
    %c0_30 = arith.constant 0 : index
    %c0_31 = arith.constant 0 : index
    %37 = vector.load %arg10[%c0_30, %c0_31] : memref<1x32xf32, #tpu.memory_space<vmem>>, vector<1x32xf32>
    %38 = vector.broadcast %37 : vector<1x32xf32> to vector<8x32xf32>
    %39 = arith.mulf %36, %38 : vector<8x32xf32>
    %cst_32 = arith.constant dense<0.000000e+00> : vector<8xf32>
    %40 = vector.multi_reduction <add>, %39, %cst_32 [1] : vector<8x32xf32> to vector<8xf32>
    %41 = vector.shape_cast %40 : vector<8xf32> to vector<8x1xf32>
    %c0_33 = arith.constant 0 : index
    %c0_34 = arith.constant 0 : index
    %42 = vector.load %arg11[%c0_33, %c0_34] : memref<1x1xf32, #tpu.memory_space<vmem>>, vector<1x1xf32>
    %43 = vector.broadcast %42 : vector<1x1xf32> to vector<8x1xf32>
    %44 = arith.addf %41, %43 : vector<8x1xf32>
    %c0_35 = arith.constant 0 : index
    %c0_36 = arith.constant 0 : index
    %45 = vector.load %arg12[%c0_35, %c0_36] : memref<8x1xf32, #tpu.memory_space<vmem>>, vector<8x1xf32>
    tpu.vector_store %arg12[%c0_35, %c0_36], %44 {strides = array<i32>} : memref<8x1xf32, #tpu.memory_space<vmem>>, vector<8x1xf32>,
    return
  }
  func.func @transform_0(%arg0: i32) -> (i32, i32) {
    %c0_i32 = arith.constant 0 : i32
    %c0_i32_0 = arith.constant 0 : i32
    return %arg0, %c0_i32 : i32, i32
  }
  func.func @transform_1(%arg0: i32) -> (i32, i32) {
    %c0_i32 = arith.constant 0 : i32
    %c0_i32_0 = arith.constant 0 : i32
    %c0_i32_1 = arith.constant 0 : i32
    return %c0_i32, %c0_i32_0 : i32, i32
  }
  func.func @transform_2(%arg0: i32) -> (i32, i32) {
    %c0_i32 = arith.constant 0 : i32
    %c0_i32_0 = arith.constant 0 : i32
    %c0_i32_1 = arith.constant 0 : i32
    return %c0_i32, %c0_i32_0 : i32, i32
  }
  func.func @transform_3(%arg0: i32) -> (i32, i32) {
    %c0_i32 = arith.constant 0 : i32
    %c0_i32_0 = arith.constant 0 : i32
    %c0_i32_1 = arith.constant 0 : i32
    return %c0_i32, %c0_i32_0 : i32, i32
  }
  func.func @transform_4(%arg0: i32) -> (i32, i32) {
    %c0_i32 = arith.constant 0 : i32
    %c0_i32_0 = arith.constant 0 : i32
    %c0_i32_1 = arith.constant 0 : i32
    return %c0_i32, %c0_i32_0 : i32, i32
  }
  func.func @transform_5(%arg0: i32) -> (i32, i32) {
    %c0_i32 = arith.constant 0 : i32
    %c0_i32_0 = arith.constant 0 : i32
    %c0_i32_1 = arith.constant 0 : i32
    return %c0_i32, %c0_i32_0 : i32, i32
  }
  func.func @transform_6(%arg0: i32) -> (i32, i32) {
    %c0_i32 = arith.constant 0 : i32
    %c0_i32_0 = arith.constant 0 : i32
    %c0_i32_1 = arith.constant 0 : i32
    return %c0_i32, %c0_i32_0 : i32, i32
  }
  func.func @transform_7(%arg0: i32) -> (i32, i32) {
    %c0_i32 = arith.constant 0 : i32
    %c0_i32_0 = arith.constant 0 : i32
    %c0_i32_1 = arith.constant 0 : i32
    return %c0_i32, %c0_i32_0 : i32, i32
  }
  func.func @transform_8(%arg0: i32) -> (i32, i32) {
    %c0_i32 = arith.constant 0 : i32
    %c0_i32_0 = arith.constant 0 : i32
    %c0_i32_1 = arith.constant 0 : i32
    return %c0_i32, %c0_i32_0 : i32, i32
  }
  func.func @transform_9(%arg0: i32) -> (i32, i32) {
    %c0_i32 = arith.constant 0 : i32
    %c0_i32_0 = arith.constant 0 : i32
    %c0_i32_1 = arith.constant 0 : i32
    return %c0_i32, %c0_i32_0 : i32, i32
  }
  func.func @transform_10(%arg0: i32) -> (i32, i32) {
    %c0_i32 = arith.constant 0 : i32
    %c0_i32_0 = arith.constant 0 : i32
    %c0_i32_1 = arith.constant 0 : i32
    return %c0_i32, %c0_i32_0 : i32, i32
  }
  func.func @transform_11(%arg0: i32) -> (i32, i32) {
    %c0_i32 = arith.constant 0 : i32
    %c0_i32_0 = arith.constant 0 : i32
    return %arg0, %c0_i32 : i32, i32
  }
}

</mosaic_0001>

<llo_original>
// kernel: chess_model_forward.1
$region0: #{chess_model_forward.1}
  #allocation0 [shape = 'u32[]', space=smem, size = 0x4, offset = 0x4, fixed_abs, tag = 'smem constant byte address 0x4 - core index']
  #allocation1 [shape = 'u32[144,128]{1,0:T(1,128)}', space=vmem, size = 0x12000, scoped, tag = 'internal scratch']
  #allocation2 [shape = 'bf16[8,896]{1,0:T(8,128)(2,1)}', space=vmem, size = 0x3800, scoped, tag = 'scratch operand']
  #allocation3 [shape = 'f32[1,1]{1,0:T(1,128)S(1)}', space=vmem, size = 0x200, scoped, tag = 'scoped memory for chess_model_forward.1']
  %s0 = inlined_call_operand.hbm [shape: f32[8,781], index: 0, kind: input, shape index: {}]
  %s1 = inlined_call_operand.hbm [shape: bf16[896,256], index: 1, kind: input, shape index: {}]
  %s2 = inlined_call_operand.vmem [shape: f32[1,256], index: 2, kind: input, shape index: {}]
  %s3 = inlined_call_operand.vmem [shape: bf16[256,128], index: 3, kind: input, shape index: {}]
  %s4 = inlined_call_operand.hbm [shape: f32[1,128], index: 4, kind: input, shape index: {}]
  %s5 = inlined_call_operand.vmem [shape: bf16[128,64], index: 5, kind: input, shape index: {}]
  %s6 = inlined_call_operand.vmem [shape: f32[1,64], index: 6, kind: input, shape index: {}]
  %s7 = inlined_call_operand.vmem [shape: bf16[64,32], index: 7, kind: input, shape index: {}]
  %s8 = inlined_call_operand.vmem [shape: f32[1,32], index: 8, kind: input, shape index: {}]
  %s9 = inlined_call_operand.vmem [shape: f32[1,32], index: 9, kind: input, shape index: {}]
  %s10 = inlined_call_operand.<no memory space> [shape: f32[1,1], index: 10, kind: input, shape index: {}]
  %s11 = inlined_call_operand.vmem [shape: f32[8,1], index: 11, kind: output, shape index: {}]
  %s12 = sld [smem:[#allocation0]]
  $region66: #{chess_model_forward.1} parent=0
    _
  %s14 = ssub.s32 1, %s12
  %s15 = scalar_select 0, %s14, %s12
  %v16 = vstv %s10
  %17 = vst [vmem:[#allocation3] sm:$0x1] %v16
  $region1: #{chess_model_forward.1} parent=0
    #allocation4 [shape = 'u8[28672]{0}', space=vmem, size = 0x7000, scoped, tag = 'input window, operand 0, single buffered']
    #allocation5 [shape = 's32[1]{0}', space=sflag, size = 0x4, scoped, tag = 'scoped memory for chess_model_forward.1']
    #allocation6 [shape = 'u8[458752]{0}', space=vmem, size = 0x70000, scoped, tag = 'input window, operand 1, single buffered']
    #allocation7 [shape = 's32[1]{0}', space=sflag, size = 0x4, scoped, tag = 'scoped memory for chess_model_forward.1']
    #allocation8 [shape = 'u8[512]{0}', space=vmem, size = 0x400, scoped, tag = 'input window, operand 4, single buffered']
    %18 = vsyncpa [#allocation5], 0
    %19 = vsyncpa [#allocation7], 0
    // Predicated region
    $region2: #{chess_model_forward.1} parent=1 // pred_check
      _
    $region3: #{chess_model_forward.1} parent=1 // pred_check_branch
      %21 = sbr.rel (0) target = $region5
    $region4: #{chess_model_forward.1} parent=1 // pred_region
      %s23 = ssub.s32 896, 896
      %24 = vsyncadd [#allocation5], %s23
      %s26 = sshll.u32 [#allocation4], 4
      %s27 = int_to_ptr.vmem [resolvable:$true] %s26
      %29 = dma.hbm_to_vmem [thread:$0]  %s0, 896, %s27, [#allocation5]
    $region5: #{chess_model_forward.1} parent=1 // pred_fallthru
      _
    // Predicated region
    $region6: #{chess_model_forward.1} parent=1 // pred_check
      _
    $region7: #{chess_model_forward.1} parent=1 // pred_check_branch
      %31 = sbr.rel (0) target = $region9
    $region8: #{chess_model_forward.1} parent=1 // pred_region
      %s33 = ssub.s32 14336, 14336
      %34 = vsyncadd [#allocation7], %s33
      %s35 = sshll.u32 [#allocation6], 4
      %s36 = int_to_ptr.vmem [resolvable:$true] %s35
      %41 = dma.hbm_to_vmem [thread:$0]  %s1, 14336, %s36, [#allocation7], 128, 128, 8
    $region9: #{chess_model_forward.1} parent=1 // pred_fallthru
      _
    // Predicated region
    $region10: #{chess_model_forward.1} parent=1 // pred_check
      _
    $region11: #{chess_model_forward.1} parent=1 // pred_check_branch
      %43 = sbr.rel (0) target = $region13
    $region12: #{chess_model_forward.1} parent=1 // pred_region
      _
    $region13: #{chess_model_forward.1} parent=1 // pred_fallthru
      _
    // Predicated region
    $region14: #{chess_model_forward.1} parent=1 // pred_check
      _
    $region15: #{chess_model_forward.1} parent=1 // pred_check_branch
      %45 = sbr.rel (0) target = $region17
    $region16: #{chess_model_forward.1} parent=1 // pred_region
      _
    $region17: #{chess_model_forward.1} parent=1 // pred_fallthru
      _
    // Predicated region
    $region18: #{chess_model_forward.1} parent=1 // pred_check
      _
    $region19: #{chess_model_forward.1} parent=1 // pred_check_branch
      %47 = sbr.rel (0) target = $region21
    $region20: #{chess_model_forward.1} parent=1 // pred_region
      %s49 = ssub.s32 16, 16
      %50 = vsyncadd [#allocation7], %s49
      %s52 = sshll.u32 [#allocation8], 4
      %s53 = int_to_ptr.vmem [resolvable:$true] %s52
      %55 = dma.hbm_to_vmem [thread:$0]  %s4, 16, %s53, [#allocation7]
    $region21: #{chess_model_forward.1} parent=1 // pred_fallthru
      _
    // Predicated region
    $region22: #{chess_model_forward.1} parent=1 // pred_check
      _
    $region23: #{chess_model_forward.1} parent=1 // pred_check_branch
      %57 = sbr.rel (0) target = $region25
    $region24: #{chess_model_forward.1} parent=1 // pred_region
      _
    $region25: #{chess_model_forward.1} parent=1 // pred_fallthru
      _
    // Predicated region
    $region26: #{chess_model_forward.1} parent=1 // pred_check
      _
    $region27: #{chess_model_forward.1} parent=1 // pred_check_branch
      %59 = sbr.rel (0) target = $region29
    $region28: #{chess_model_forward.1} parent=1 // pred_region
      _
    $region29: #{chess_model_forward.1} parent=1 // pred_fallthru
      _
    // Predicated region
    $region30: #{chess_model_forward.1} parent=1 // pred_check
      _
    $region31: #{chess_model_forward.1} parent=1 // pred_check_branch
      %61 = sbr.rel (0) target = $region33
    $region32: #{chess_model_forward.1} parent=1 // pred_region
      _
    $region33: #{chess_model_forward.1} parent=1 // pred_fallthru
      _
    // Predicated region
    $region34: #{chess_model_forward.1} parent=1 // pred_check
      _
    $region35: #{chess_model_forward.1} parent=1 // pred_check_branch
      %63 = sbr.rel (0) target = $region37
    $region36: #{chess_model_forward.1} parent=1 // pred_region
      _
    $region37: #{chess_model_forward.1} parent=1 // pred_fallthru
      _
    // Predicated region
    $region38: #{chess_model_forward.1} parent=1 // pred_check
      _
    $region39: #{chess_model_forward.1} parent=1 // pred_check_branch
      %65 = sbr.rel (0) target = $region41
    $region40: #{chess_model_forward.1} parent=1 // pred_region
      _
    $region41: #{chess_model_forward.1} parent=1 // pred_fallthru
      _
    // Predicated region
    $region42: #{chess_model_forward.1} parent=1 // pred_check
      _
    $region43: #{chess_model_forward.1} parent=1 // pred_check_branch
      %67 = sbr.rel (0) target = $region45
    $region44: #{chess_model_forward.1} parent=1 // pred_region
      _
    $region45: #{chess_model_forward.1} parent=1 // pred_fallthru
      _
    // Predicated region
    $region46: #{chess_model_forward.1} parent=1 // pred_check
      _
    $region47: #{chess_model_forward.1} parent=1 // pred_check_branch
      %69 = sbr.rel (0) target = $region49
    $region48: #{chess_model_forward.1} parent=1 // pred_region
      %70 = dma.done [#allocation5], 896
    $region49: #{chess_model_forward.1} parent=1 // pred_fallthru
      _
    // Predicated region
    $region50: #{chess_model_forward.1} parent=1 // pred_check
      _
    $region51: #{chess_model_forward.1} parent=1 // pred_check_branch
      %72 = sbr.rel (0) target = $region53
    $region52: #{chess_model_forward.1} parent=1 // pred_region
      %73 = dma.done [#allocation7], 14336
    $region53: #{chess_model_forward.1} parent=1 // pred_fallthru
      _
    // Predicated region
    $region54: #{chess_model_forward.1} parent=1 // pred_check
      _
    $region55: #{chess_model_forward.1} parent=1 // pred_check_branch
      %75 = sbr.rel (0) target = $region57
    $region56: #{chess_model_forward.1} parent=1 // pred_region
      %76 = dma.done [#allocation7], 16
    $region57: #{chess_model_forward.1} parent=1 // pred_fallthru
      _
    %v78 = vld [vmem:[#allocation4] sm:$0xff]
    %v79 = vld [vmem:[#allocation4 + $0x8] sm:$0xff]
    %v80 = vld [vmem:[#allocation4 + $0x10] sm:$0xff]
    %v81 = vld [vmem:[#allocation4 + $0x18] sm:$0xff]
    %v82 = vld [vmem:[#allocation4 + $0x20] sm:$0xff]
    %v83 = vld [vmem:[#allocation4 + $0x28] sm:$0xff]
    %v84 = vld [vmem:[#allocation4 + $0x30] sm:$0xff]
    %v85 = vpack.c.bf16 %v78, %v78
    %v86 = vpack.c.bf16 %v79, %v79
    %v87 = vpack.c.bf16 %v80, %v80
    %v88 = vpack.c.bf16 %v81, %v81
    %v89 = vpack.c.bf16 %v82, %v82
    %v90 = vpack.c.bf16 %v83, %v83
    %v91 = vpack.c.bf16 %v84, %v84
    %v99 = vunpack.c.l.b16 %v85
    %v100 = vunpack.c.l.b16 %v86
    %v101 = vunpack.c.l.b16 %v87
    %v102 = vunpack.c.l.b16 %v88
    %v103 = vunpack.c.l.b16 %v89
    %v104 = vunpack.c.l.b16 %v90
    %v105 = vunpack.c.l.b16 %v91
    %v106 = vpack.c.b16 %v100, %v99
    %v107 = vpack.c.b16 %v102, %v101
    %v108 = vpack.c.b16 %v104, %v103
    %v109 = vpack.c.b16 %v105, %v105
    %114 = vst [vmem:[#allocation2] sm:$0xff] %v106
    %115 = vst [vmem:[#allocation2 + $0x8] sm:$0xff] %v107
    %116 = vst [vmem:[#allocation2 + $0x10] sm:$0xff] %v108
    %vm117 = vcmask 101376
    %118 = vst.msk [vmem:[#allocation2 + $0x18] sm:$0xf] %vm117, %v109
    %vm119 = vcmask 1043560
    %120 = vst.msk [vmem:[#allocation2 + $0x18] sm:$0xf] %vm119, 0
    %v121 = vld [vmem:[#allocation2] sm:$0xff]
    %v122 = vld [vmem:[#allocation2 + $0x8] sm:$0xff]
    %v123 = vld [vmem:[#allocation2 + $0x10] sm:$0xff]
    %v124 = vld [vmem:[#allocation2 + $0x18] sm:$0xf]
    %v125 = vld [vmem:[#allocation6] sm:$0xff]
    %v126 = vld [vmem:[#allocation6 + $0x8] sm:$0xff]
    %v127 = vld [vmem:[#allocation6 + $0x10] sm:$0xff]
    %v128 = vld [vmem:[#allocation6 + $0x18] sm:$0xff]
    %v129 = vld [vmem:[#allocation6 + $0x20] sm:$0xff]
    %v130 = vld [vmem:[#allocation6 + $0x28] sm:$0xff]
    %v131 = vld [vmem:[#allocation6 + $0x30] sm:$0xff]
    %v132 = vld [vmem:[#allocation6 + $0x38] sm:$0xff]
    %v133 = vld [vmem:[#allocation6 + $0x40] sm:$0xff]
    %v134 = vld [vmem:[#allocation6 + $0x48] sm:$0xff]
    %v135 = vld [vmem:[#allocation6 + $0x50] sm:$0xff]
    %v136 = vld [vmem:[#allocation6 + $0x58] sm:$0xff]
    %v137 = vld [vmem:[#allocation6 + $0x60] sm:$0xff]
    %v138 = vld [vmem:[#allocation6 + $0x68] sm:$0xff]
    %v139 = vld [vmem:[#allocation6 + $0x70] sm:$0xff]
    %v140 = vld [vmem:[#allocation6 + $0x78] sm:$0xff]
    %v141 = vld [vmem:[#allocation6 + $0x80] sm:$0xff]
    %v142 = vld [vmem:[#allocation6 + $0x88] sm:$0xff]
    %v143 = vld [vmem:[#allocation6 + $0x90] sm:$0xff]
    %v144 = vld [vmem:[#allocation6 + $0x98] sm:$0xff]
    %v145 = vld [vmem:[#allocation6 + $0xa0] sm:$0xff]
    %v146 = vld [vmem:[#allocation6 + $0xa8] sm:$0xff]
    %v147 = vld [vmem:[#allocation6 + $0xb0] sm:$0xff]
    %v148 = vld [vmem:[#allocation6 + $0xb8] sm:$0xff]
    %v149 = vld [vmem:[#allocation6 + $0xc0] sm:$0xff]
    %v150 = vld [vmem:[#allocation6 + $0xc8] sm:$0xff]
    %v151 = vld [vmem:[#allocation6 + $0xd0] sm:$0xff]
    %v152 = vld [vmem:[#allocation6 + $0xd8] sm:$0xff]
    %v153 = vld [vmem:[#allocation6 + $0xe0] sm:$0xff]
    %v154 = vld [vmem:[#allocation6 + $0xe8] sm:$0xff]
    %v155 = vld [vmem:[#allocation6 + $0xf0] sm:$0xff]
    %v156 = vld [vmem:[#allocation6 + $0xf8] sm:$0xff]
    %v157 = vld [vmem:[#allocation6 + $0x100] sm:$0xff]
    %v158 = vld [vmem:[#allocation6 + $0x108] sm:$0xff]
    %v159 = vld [vmem:[#allocation6 + $0x110] sm:$0xff]
    %v160 = vld [vmem:[#allocation6 + $0x118] sm:$0xff]
    %v161 = vld [vmem:[#allocation6 + $0x120] sm:$0xff]
    %v162 = vld [vmem:[#allocation6 + $0x128] sm:$0xff]
    %v163 = vld [vmem:[#allocation6 + $0x130] sm:$0xff]
    %v164 = vld [vmem:[#allocation6 + $0x138] sm:$0xff]
    %v165 = vld [vmem:[#allocation6 + $0x140] sm:$0xff]
    %v166 = vld [vmem:[#allocation6 + $0x148] sm:$0xff]
    %v167 = vld [vmem:[#allocation6 + $0x150] sm:$0xff]
    %v168 = vld [vmem:[#allocation6 + $0x158] sm:$0xff]
    %v169 = vld [vmem:[#allocation6 + $0x160] sm:$0xff]
    %v170 = vld [vmem:[#allocation6 + $0x168] sm:$0xff]
    %v171 = vld [vmem:[#allocation6 + $0x170] sm:$0xff]
    %v172 = vld [vmem:[#allocation6 + $0x178] sm:$0xff]
    %v173 = vld [vmem:[#allocation6 + $0x180] sm:$0xff]
    %v174 = vld [vmem:[#allocation6 + $0x188] sm:$0xff]
    %v175 = vld [vmem:[#allocation6 + $0x190] sm:$0xff]
    %v176 = vld [vmem:[#allocation6 + $0x198] sm:$0xff]
    %v177 = vld [vmem:[#allocation6 + $0x1a0] sm:$0xff]
    %v178 = vld [vmem:[#allocation6 + $0x1a8] sm:$0xff]
    %v179 = vld [vmem:[#allocation6 + $0x1b0] sm:$0xff]
    %v180 = vld [vmem:[#allocation6 + $0x1b8] sm:$0xff]
    %v181 = vld [vmem:[#allocation6 + $0x1c0] sm:$0xff]
    %v182 = vld [vmem:[#allocation6 + $0x1c8] sm:$0xff]
    %v183 = vld [vmem:[#allocation6 + $0x1d0] sm:$0xff]
    %v184 = vld [vmem:[#allocation6 + $0x1d8] sm:$0xff]
    %v185 = vld [vmem:[#allocation6 + $0x1e0] sm:$0xff]
    %v186 = vld [vmem:[#allocation6 + $0x1e8] sm:$0xff]
    %v187 = vld [vmem:[#allocation6 + $0x1f0] sm:$0xff]
    %v188 = vld [vmem:[#allocation6 + $0x1f8] sm:$0xff]
    %v189 = vld [vmem:[#allocation6 + $0x200] sm:$0xff]
    %v190 = vld [vmem:[#allocation6 + $0x208] sm:$0xff]
    %v191 = vld [vmem:[#allocation6 + $0x210] sm:$0xff]
    %v192 = vld [vmem:[#allocation6 + $0x218] sm:$0xff]
    %v193 = vld [vmem:[#allocation6 + $0x220] sm:$0xff]
    %v194 = vld [vmem:[#allocation6 + $0x228] sm:$0xff]
    %v195 = vld [vmem:[#allocation6 + $0x230] sm:$0xff]
    %v196 = vld [vmem:[#allocation6 + $0x238] sm:$0xff]
    %v197 = vld [vmem:[#allocation6 + $0x240] sm:$0xff]
    %v198 = vld [vmem:[#allocation6 + $0x248] sm:$0xff]
    %v199 = vld [vmem:[#allocation6 + $0x250] sm:$0xff]
    %v200 = vld [vmem:[#allocation6 + $0x258] sm:$0xff]
    %v201 = vld [vmem:[#allocation6 + $0x260] sm:$0xff]
    %v202 = vld [vmem:[#allocation6 + $0x268] sm:$0xff]
    %v203 = vld [vmem:[#allocation6 + $0x270] sm:$0xff]
    %v204 = vld [vmem:[#allocation6 + $0x278] sm:$0xff]
    %v205 = vld [vmem:[#allocation6 + $0x280] sm:$0xff]
    %v206 = vld [vmem:[#allocation6 + $0x288] sm:$0xff]
    %v207 = vld [vmem:[#allocation6 + $0x290] sm:$0xff]
    %v208 = vld [vmem:[#allocation6 + $0x298] sm:$0xff]
    %v209 = vld [vmem:[#allocation6 + $0x2a0] sm:$0xff]
    %v210 = vld [vmem:[#allocation6 + $0x2a8] sm:$0xff]
    %v211 = vld [vmem:[#allocation6 + $0x2b0] sm:$0xff]
    %v212 = vld [vmem:[#allocation6 + $0x2b8] sm:$0xff]
    %v213 = vld [vmem:[#allocation6 + $0x2c0] sm:$0xff]
    %v214 = vld [vmem:[#allocation6 + $0x2c8] sm:$0xff]
    %v215 = vld [vmem:[#allocation6 + $0x2d0] sm:$0xff]
    %v216 = vld [vmem:[#allocation6 + $0x2d8] sm:$0xff]
    %v217 = vld [vmem:[#allocation6 + $0x2e0] sm:$0xff]
    %v218 = vld [vmem:[#allocation6 + $0x2e8] sm:$0xff]
    %v219 = vld [vmem:[#allocation6 + $0x2f0] sm:$0xff]
    %v220 = vld [vmem:[#allocation6 + $0x2f8] sm:$0xff]
    %v221 = vld [vmem:[#allocation6 + $0x300] sm:$0xff]
    %v222 = vld [vmem:[#allocation6 + $0x308] sm:$0xff]
    %v223 = vld [vmem:[#allocation6 + $0x310] sm:$0xff]
    %v224 = vld [vmem:[#allocation6 + $0x318] sm:$0xff]
    %v225 = vld [vmem:[#allocation6 + $0x320] sm:$0xff]
    %v226 = vld [vmem:[#allocation6 + $0x328] sm:$0xff]
    %v227 = vld [vmem:[#allocation6 + $0x330] sm:$0xff]
    %v228 = vld [vmem:[#allocation6 + $0x338] sm:$0xff]
    %v229 = vld [vmem:[#allocation6 + $0x340] sm:$0xff]
    %v230 = vld [vmem:[#allocation6 + $0x348] sm:$0xff]
    %v231 = vld [vmem:[#allocation6 + $0x350] sm:$0xff]
    %v232 = vld [vmem:[#allocation6 + $0x358] sm:$0xff]
    %v233 = vld [vmem:[#allocation6 + $0x360] sm:$0xff]
    %v234 = vld [vmem:[#allocation6 + $0x368] sm:$0xff]
    %v235 = vld [vmem:[#allocation6 + $0x370] sm:$0xff]
    %v236 = vld [vmem:[#allocation6 + $0x378] sm:$0xff]
    %v237 = vld [vmem:[%s2] sm:$0x3]
    %v239 = vlaneseq
    %v240 = vshrl.u32 %v239, 7
    %v241 = vsub.s32 0, %v240
    %v242 = vrot.slane %v237, %v241
    %v243 = vlaneseq
    %v244 = vshrl.u32 %v243, 7
    %v245 = vsub.s32 1, %v244
    %v246 = vrot.slane %v237, %v245
    %v253 = vunpack.c.l.b16 %v121
    %v254 = vunpack.c.h.b16 %v121
    %v255 = vunpack.c.l.b16 %v122
    %v256 = vunpack.c.h.b16 %v122
    %v257 = vunpack.c.l.b16 %v123
    %v258 = vunpack.c.h.b16 %v123
    %v259 = vunpack.c.l.b16 %v124
    %v260 = vpack.c.b16 %v253, %v253
    %v261 = vpack.c.b16 %v254, %v254
    %v262 = vpack.c.b16 %v255, %v255
    %v263 = vpack.c.b16 %v256, %v256
    %v264 = vpack.c.b16 %v257, %v257
    %v265 = vpack.c.b16 %v258, %v258
    %v266 = vpack.c.b16 %v259, %v259
    %v386 = vunpack.c.l.b16 %v125
    %v387 = vunpack.c.h.b16 %v125
    %v388 = vunpack.c.l.b16 %v126
    %v389 = vunpack.c.h.b16 %v126
    %v390 = vunpack.c.l.b16 %v127
    %v391 = vunpack.c.h.b16 %v127
    %v392 = vunpack.c.l.b16 %v128
    %v393 = vunpack.c.h.b16 %v128
    %v394 = vunpack.c.l.b16 %v129
    %v395 = vunpack.c.h.b16 %v129
    %v396 = vunpack.c.l.b16 %v130
    %v397 = vunpack.c.h.b16 %v130
    %v398 = vunpack.c.l.b16 %v131
    %v399 = vunpack.c.h.b16 %v131
    %v400 = vunpack.c.l.b16 %v132
    %v401 = vunpack.c.h.b16 %v132
    %v402 = vunpack.c.l.b16 %v133
    %v403 = vunpack.c.h.b16 %v133
    %v404 = vunpack.c.l.b16 %v134
    %v405 = vunpack.c.h.b16 %v134
    %v406 = vunpack.c.l.b16 %v135
    %v407 = vunpack.c.h.b16 %v135
    %v408 = vunpack.c.l.b16 %v136
    %v409 = vunpack.c.h.b16 %v136
    %v410 = vunpack.c.l.b16 %v137
    %v411 = vunpack.c.h.b16 %v137
    %v412 = vunpack.c.l.b16 %v138
    %v413 = vunpack.c.h.b16 %v138
    %v414 = vunpack.c.l.b16 %v139
    %v415 = vunpack.c.h.b16 %v139
    %v416 = vunpack.c.l.b16 %v140
    %v417 = vunpack.c.h.b16 %v140
    %v418 = vunpack.c.l.b16 %v141
    %v419 = vunpack.c.h.b16 %v141
    %v420 = vunpack.c.l.b16 %v142
    %v421 = vunpack.c.h.b16 %v142
    %v422 = vunpack.c.l.b16 %v143
    %v423 = vunpack.c.h.b16 %v143
    %v424 = vunpack.c.l.b16 %v144
    %v425 = vunpack.c.h.b16 %v144
    %v426 = vunpack.c.l.b16 %v145
    %v427 = vunpack.c.h.b16 %v145
    %v428 = vunpack.c.l.b16 %v146
    %v429 = vunpack.c.h.b16 %v146
    %v430 = vunpack.c.l.b16 %v147
    %v431 = vunpack.c.h.b16 %v147
    %v432 = vunpack.c.l.b16 %v148
    %v433 = vunpack.c.h.b16 %v148
    %v434 = vunpack.c.l.b16 %v149
    %v435 = vunpack.c.h.b16 %v149
    %v436 = vunpack.c.l.b16 %v150
    %v437 = vunpack.c.h.b16 %v150
    %v438 = vunpack.c.l.b16 %v151
    %v439 = vunpack.c.h.b16 %v151
    %v440 = vunpack.c.l.b16 %v152
    %v441 = vunpack.c.h.b16 %v152
    %v442 = vunpack.c.l.b16 %v153
    %v443 = vunpack.c.h.b16 %v153
    %v444 = vunpack.c.l.b16 %v154
    %v445 = vunpack.c.h.b16 %v154
    %v446 = vunpack.c.l.b16 %v155
    %v447 = vunpack.c.h.b16 %v155
    %v448 = vunpack.c.l.b16 %v156
    %v449 = vunpack.c.h.b16 %v156
    %v450 = vunpack.c.l.b16 %v157
    %v451 = vunpack.c.h.b16 %v157
    %v452 = vunpack.c.l.b16 %v158
    %v453 = vunpack.c.h.b16 %v158
    %v454 = vunpack.c.l.b16 %v159
    %v455 = vunpack.c.h.b16 %v159
    %v456 = vunpack.c.l.b16 %v160
    %v457 = vunpack.c.h.b16 %v160
    %v458 = vunpack.c.l.b16 %v161
    %v459 = vunpack.c.h.b16 %v161
    %v460 = vunpack.c.l.b16 %v162
    %v461 = vunpack.c.h.b16 %v162
    %v462 = vunpack.c.l.b16 %v163
    %v463 = vunpack.c.h.b16 %v163
    %v464 = vunpack.c.l.b16 %v164
    %v465 = vunpack.c.h.b16 %v164
    %v466 = vunpack.c.l.b16 %v165
    %v467 = vunpack.c.h.b16 %v165
    %v468 = vunpack.c.l.b16 %v166
    %v469 = vunpack.c.h.b16 %v166
    %v470 = vunpack.c.l.b16 %v167
    %v471 = vunpack.c.h.b16 %v167
    %v472 = vunpack.c.l.b16 %v168
    %v473 = vunpack.c.h.b16 %v168
    %v474 = vunpack.c.l.b16 %v169
    %v475 = vunpack.c.h.b16 %v169
    %v476 = vunpack.c.l.b16 %v170
    %v477 = vunpack.c.h.b16 %v170
    %v478 = vunpack.c.l.b16 %v171
    %v479 = vunpack.c.h.b16 %v171
    %v480 = vunpack.c.l.b16 %v172
    %v481 = vunpack.c.h.b16 %v172
    %v482 = vunpack.c.l.b16 %v173
    %v483 = vunpack.c.h.b16 %v173
    %v484 = vunpack.c.l.b16 %v174
    %v485 = vunpack.c.h.b16 %v174
    %v486 = vunpack.c.l.b16 %v175
    %v487 = vunpack.c.h.b16 %v175
    %v488 = vunpack.c.l.b16 %v176
    %v489 = vunpack.c.h.b16 %v176
    %v490 = vunpack.c.l.b16 %v177
    %v491 = vunpack.c.h.b16 %v177
    %v492 = vunpack.c.l.b16 %v178
    %v493 = vunpack.c.h.b16 %v178
    %v494 = vunpack.c.l.b16 %v179
    %v495 = vunpack.c.h.b16 %v179
    %v496 = vunpack.c.l.b16 %v180
    %v497 = vunpack.c.h.b16 %v180
    %v498 = vunpack.c.l.b16 %v181
    %v499 = vunpack.c.h.b16 %v181
    %v500 = vunpack.c.l.b16 %v182
    %v501 = vunpack.c.h.b16 %v182
    %v502 = vunpack.c.l.b16 %v183
    %v503 = vunpack.c.h.b16 %v183
    %v504 = vunpack.c.l.b16 %v184
    %v505 = vunpack.c.h.b16 %v184
    %v506 = vunpack.c.l.b16 %v185
    %v507 = vunpack.c.h.b16 %v185
    %v508 = vunpack.c.l.b16 %v186
    %v509 = vunpack.c.h.b16 %v186
    %v510 = vunpack.c.l.b16 %v187
    %v511 = vunpack.c.h.b16 %v187
    %v512 = vunpack.c.l.b16 %v188
    %v513 = vunpack.c.h.b16 %v188
    %v514 = vunpack.c.l.b16 %v189
    %v515 = vunpack.c.h.b16 %v189
    %v516 = vunpack.c.l.b16 %v190
    %v517 = vunpack.c.h.b16 %v190
    %v518 = vunpack.c.l.b16 %v191
    %v519 = vunpack.c.h.b16 %v191
    %v520 = vunpack.c.l.b16 %v192
    %v521 = vunpack.c.h.b16 %v192
    %v522 = vunpack.c.l.b16 %v193
    %v523 = vunpack.c.h.b16 %v193
    %v524 = vunpack.c.l.b16 %v194
    %v525 = vunpack.c.h.b16 %v194
    %v526 = vunpack.c.l.b16 %v195
    %v527 = vunpack.c.h.b16 %v195
    %v528 = vunpack.c.l.b16 %v196
    %v529 = vunpack.c.h.b16 %v196
    %v530 = vunpack.c.l.b16 %v197
    %v531 = vunpack.c.h.b16 %v197
    %v532 = vunpack.c.l.b16 %v198
    %v533 = vunpack.c.h.b16 %v198
    %v534 = vunpack.c.l.b16 %v199
    %v535 = vunpack.c.h.b16 %v199
    %v536 = vunpack.c.l.b16 %v200
    %v537 = vunpack.c.h.b16 %v200
    %v538 = vunpack.c.l.b16 %v201
    %v539 = vunpack.c.h.b16 %v201
    %v540 = vunpack.c.l.b16 %v202
    %v541 = vunpack.c.h.b16 %v202
    %v542 = vunpack.c.l.b16 %v203
    %v543 = vunpack.c.h.b16 %v203
    %v544 = vunpack.c.l.b16 %v204
    %v545 = vunpack.c.h.b16 %v204
    %v546 = vunpack.c.l.b16 %v205
    %v547 = vunpack.c.h.b16 %v205
    %v548 = vunpack.c.l.b16 %v206
    %v549 = vunpack.c.h.b16 %v206
    %v550 = vunpack.c.l.b16 %v207
    %v551 = vunpack.c.h.b16 %v207
    %v552 = vunpack.c.l.b16 %v208
    %v553 = vunpack.c.h.b16 %v208
    %v554 = vunpack.c.l.b16 %v209
    %v555 = vunpack.c.h.b16 %v209
    %v556 = vunpack.c.l.b16 %v210
    %v557 = vunpack.c.h.b16 %v210
    %v558 = vunpack.c.l.b16 %v211
    %v559 = vunpack.c.h.b16 %v211
    %v560 = vunpack.c.l.b16 %v212
    %v561 = vunpack.c.h.b16 %v212
    %v562 = vunpack.c.l.b16 %v213
    %v563 = vunpack.c.h.b16 %v213
    %v564 = vunpack.c.l.b16 %v214
    %v565 = vunpack.c.h.b16 %v214
    %v566 = vunpack.c.l.b16 %v215
    %v567 = vunpack.c.h.b16 %v215
    %v568 = vunpack.c.l.b16 %v216
    %v569 = vunpack.c.h.b16 %v216
    %v570 = vunpack.c.l.b16 %v217
    %v571 = vunpack.c.h.b16 %v217
    %v572 = vunpack.c.l.b16 %v218
    %v573 = vunpack.c.h.b16 %v218
    %v574 = vunpack.c.l.b16 %v219
    %v575 = vunpack.c.h.b16 %v219
    %v576 = vunpack.c.l.b16 %v220
    %v577 = vunpack.c.h.b16 %v220
    %v578 = vunpack.c.l.b16 %v221
    %v579 = vunpack.c.h.b16 %v221
    %v580 = vunpack.c.l.b16 %v222
    %v581 = vunpack.c.h.b16 %v222
    %v582 = vunpack.c.l.b16 %v223
    %v583 = vunpack.c.h.b16 %v223
    %v584 = vunpack.c.l.b16 %v224
    %v585 = vunpack.c.h.b16 %v224
    %v586 = vunpack.c.l.b16 %v225
    %v587 = vunpack.c.h.b16 %v225
    %v588 = vunpack.c.l.b16 %v226
    %v589 = vunpack.c.h.b16 %v226
    %v590 = vunpack.c.l.b16 %v227
    %v591 = vunpack.c.h.b16 %v227
    %v592 = vunpack.c.l.b16 %v228
    %v593 = vunpack.c.h.b16 %v228
    %v594 = vunpack.c.l.b16 %v229
    %v595 = vunpack.c.h.b16 %v229
    %v596 = vunpack.c.l.b16 %v230
    %v597 = vunpack.c.h.b16 %v230
    %v598 = vunpack.c.l.b16 %v231
    %v599 = vunpack.c.h.b16 %v231
    %v600 = vunpack.c.l.b16 %v232
    %v601 = vunpack.c.h.b16 %v232
    %v602 = vunpack.c.l.b16 %v233
    %v603 = vunpack.c.h.b16 %v233
    %v604 = vunpack.c.l.b16 %v234
    %v605 = vunpack.c.h.b16 %v234
    %v606 = vunpack.c.l.b16 %v235
    %v607 = vunpack.c.h.b16 %v235
    %v608 = vunpack.c.l.b16 %v236
    %v609 = vunpack.c.h.b16 %v236
    %v610 = vpack.c.b16 %v388, %v386
    %v611 = vpack.c.b16 %v389, %v387
    %v612 = vpack.c.b16 %v392, %v390
    %v613 = vpack.c.b16 %v393, %v391
    %v614 = vpack.c.b16 %v396, %v394
    %v615 = vpack.c.b16 %v397, %v395
    %v616 = vpack.c.b16 %v400, %v398
    %v617 = vpack.c.b16 %v401, %v399
    %v618 = vpack.c.b16 %v404, %v402
    %v619 = vpack.c.b16 %v405, %v403
    %v620 = vpack.c.b16 %v408, %v406
    %v621 = vpack.c.b16 %v409, %v407
    %v622 = vpack.c.b16 %v412, %v410
    %v623 = vpack.c.b16 %v413, %v411
    %v624 = vpack.c.b16 %v416, %v414
    %v625 = vpack.c.b16 %v417, %v415
    %v626 = vpack.c.b16 %v420, %v418
    %v627 = vpack.c.b16 %v421, %v419
    %v628 = vpack.c.b16 %v424, %v422
    %v629 = vpack.c.b16 %v425, %v423
    %v630 = vpack.c.b16 %v428, %v426
    %v631 = vpack.c.b16 %v429, %v427
    %v632 = vpack.c.b16 %v432, %v430
    %v633 = vpack.c.b16 %v433, %v431
    %v634 = vpack.c.b16 %v436, %v434
    %v635 = vpack.c.b16 %v437, %v435
    %v636 = vpack.c.b16 %v440, %v438
    %v637 = vpack.c.b16 %v441, %v439
    %v638 = vpack.c.b16 %v444, %v442
    %v639 = vpack.c.b16 %v445, %v443
    %v640 = vpack.c.b16 %v448, %v446
    %v641 = vpack.c.b16 %v449, %v447
    %v642 = vpack.c.b16 %v452, %v450
    %v643 = vpack.c.b16 %v453, %v451
    %v644 = vpack.c.b16 %v456, %v454
    %v645 = vpack.c.b16 %v457, %v455
    %v646 = vpack.c.b16 %v460, %v458
    %v647 = vpack.c.b16 %v461, %v459
    %v648 = vpack.c.b16 %v464, %v462
    %v649 = vpack.c.b16 %v465, %v463
    %v650 = vpack.c.b16 %v468, %v466
    %v651 = vpack.c.b16 %v469, %v467
    %v652 = vpack.c.b16 %v472, %v470
    %v653 = vpack.c.b16 %v473, %v471
    %v654 = vpack.c.b16 %v476, %v474
    %v655 = vpack.c.b16 %v477, %v475
    %v656 = vpack.c.b16 %v480, %v478
    %v657 = vpack.c.b16 %v481, %v479
    %v658 = vpack.c.b16 %v484, %v482
    %v659 = vpack.c.b16 %v485, %v483
    %v660 = vpack.c.b16 %v488, %v486
    %v661 = vpack.c.b16 %v489, %v487
    %v662 = vpack.c.b16 %v492, %v490
    %v663 = vpack.c.b16 %v493, %v491
    %v664 = vpack.c.b16 %v496, %v494
    %v665 = vpack.c.b16 %v497, %v495
    %v666 = vpack.c.b16 %v500, %v498
    %v667 = vpack.c.b16 %v501, %v499
    %v668 = vpack.c.b16 %v504, %v502
    %v669 = vpack.c.b16 %v505, %v503
    %v670 = vpack.c.b16 %v508, %v506
    %v671 = vpack.c.b16 %v509, %v507
    %v672 = vpack.c.b16 %v512, %v510
    %v673 = vpack.c.b16 %v513, %v511
    %v674 = vpack.c.b16 %v516, %v514
    %v675 = vpack.c.b16 %v517, %v515
    %v676 = vpack.c.b16 %v520, %v518
    %v677 = vpack.c.b16 %v521, %v519
    %v678 = vpack.c.b16 %v524, %v522
    %v679 = vpack.c.b16 %v525, %v523
    %v680 = vpack.c.b16 %v528, %v526
    %v681 = vpack.c.b16 %v529, %v527
    %v682 = vpack.c.b16 %v532, %v530
    %v683 = vpack.c.b16 %v533, %v531
    %v684 = vpack.c.b16 %v536, %v534
    %v685 = vpack.c.b16 %v537, %v535
    %v686 = vpack.c.b16 %v540, %v538
    %v687 = vpack.c.b16 %v541, %v539
    %v688 = vpack.c.b16 %v544, %v542
    %v689 = vpack.c.b16 %v545, %v543
    %v690 = vpack.c.b16 %v548, %v546
    %v691 = vpack.c.b16 %v549, %v547
    %v692 = vpack.c.b16 %v552, %v550
    %v693 = vpack.c.b16 %v553, %v551
    %v694 = vpack.c.b16 %v556, %v554
    %v695 = vpack.c.b16 %v557, %v555
    %v696 = vpack.c.b16 %v560, %v558
    %v697 = vpack.c.b16 %v561, %v559
    %v698 = vpack.c.b16 %v564, %v562
    %v699 = vpack.c.b16 %v565, %v563
    %v700 = vpack.c.b16 %v568, %v566
    %v701 = vpack.c.b16 %v569, %v567
    %v702 = vpack.c.b16 %v572, %v570
    %v703 = vpack.c.b16 %v573, %v571
    %v704 = vpack.c.b16 %v576, %v574
    %v705 = vpack.c.b16 %v577, %v575
    %v706 = vpack.c.b16 %v580, %v578
    %v707 = vpack.c.b16 %v581, %v579
    %v708 = vpack.c.b16 %v584, %v582
    %v709 = vpack.c.b16 %v585, %v583
    %v710 = vpack.c.b16 %v588, %v586
    %v711 = vpack.c.b16 %v589, %v587
    %v712 = vpack.c.b16 %v592, %v590
    %v713 = vpack.c.b16 %v593, %v591
    %v714 = vpack.c.b16 %v596, %v594
    %v715 = vpack.c.b16 %v597, %v595
    %v716 = vpack.c.b16 %v600, %v598
    %v717 = vpack.c.b16 %v601, %v599
    %v718 = vpack.c.b16 %v604, %v602
    %v719 = vpack.c.b16 %v605, %v603
    %v720 = vpack.c.b16 %v608, %v606
    %v721 = vpack.c.b16 %v609, %v607
    %834 = vmatprep.subr.bf16.mxu0 %v611
    %835 = vmatpush1.bf16.msra.mxu0 %v610
    %836 = vmatprep.subr.bf16.mxu0 %v613
    %837 = vmatpush1.bf16.msra.mxu0 %v612
    %838 = vmatprep.subr.bf16.mxu0 %v615
    %839 = vmatpush1.bf16.msra.mxu0 %v614
    %840 = vmatprep.subr.bf16.mxu0 %v617
    %841 = vmatpush1.bf16.msra.mxu0 %v616
    %842 = vmatprep.subr.bf16.mxu0 %v619
    %843 = vmatpush1.bf16.msra.mxu0 %v618
    %844 = vmatprep.subr.bf16.mxu0 %v621
    %845 = vmatpush1.bf16.msra.mxu0 %v620
    %846 = vmatprep.subr.bf16.mxu0 %v623
    %847 = vmatpush1.bf16.msra.mxu0 %v622
    %848 = vmatprep.subr.bf16.mxu0 %v625
    %849 = vmatpush1.bf16.msra.mxu0 %v624
    %850 = vmatprep.subr.bf16.mxu0 %v627
    %851 = vmatpush1.bf16.msra.mxu0 %v626
    %852 = vmatprep.subr.bf16.mxu0 %v629
    %853 = vmatpush1.bf16.msra.mxu0 %v628
    %854 = vmatprep.subr.bf16.mxu0 %v631
    %855 = vmatpush1.bf16.msra.mxu0 %v630
    %856 = vmatprep.subr.bf16.mxu0 %v633
    %857 = vmatpush1.bf16.msra.mxu0 %v632
    %858 = vmatprep.subr.bf16.mxu0 %v635
    %859 = vmatpush1.bf16.msra.mxu0 %v634
    %860 = vmatprep.subr.bf16.mxu0 %v637
    %861 = vmatpush1.bf16.msra.mxu0 %v636
    %862 = vmatprep.subr.bf16.mxu0 %v639
    %863 = vmatpush1.bf16.msra.mxu0 %v638
    %864 = vmatprep.subr.bf16.mxu0 %v641
    %865 = vmatpush1.bf16.msra.mxu0 %v640
    %866 = vmatprep.mubr.bf16.mxu0 %v261
    %867 = vmatmul.mubr.bf16.gmra.mrb[0].mxu0 %v260
    %v868 = vpop.f32.mrb[0].mxu0
    %v869 = vadd.f32 %v242, %v868
    %v870 = vpop.f32.mrb[0].mxu0
    %v871 = vadd.f32 %v246, %v870
    %v872 = vpop.f32.mrb[0].mxu0
    %v873 = vpop.f32.mrb[0].mxu0
    %874 = vdwg.mxu0
    %875 = vmatprep.subr.bf16.mxu0 %v643
    %876 = vmatpush1.bf16.msra.mxu0 %v642
    %877 = vmatprep.subr.bf16.mxu0 %v645
    %878 = vmatpush1.bf16.msra.mxu0 %v644
    %879 = vmatprep.subr.bf16.mxu0 %v647
    %880 = vmatpush1.bf16.msra.mxu0 %v646
    %881 = vmatprep.subr.bf16.mxu0 %v649
    %882 = vmatpush1.bf16.msra.mxu0 %v648
    %883 = vmatprep.subr.bf16.mxu0 %v651
    %884 = vmatpush1.bf16.msra.mxu0 %v650
    %885 = vmatprep.subr.bf16.mxu0 %v653
    %886 = vmatpush1.bf16.msra.mxu0 %v652
    %887 = vmatprep.subr.bf16.mxu0 %v655
    %888 = vmatpush1.bf16.msra.mxu0 %v654
    %889 = vmatprep.subr.bf16.mxu0 %v657
    %890 = vmatpush1.bf16.msra.mxu0 %v656
    %891 = vmatprep.subr.bf16.mxu0 %v659
    %892 = vmatpush1.bf16.msra.mxu0 %v658
    %893 = vmatprep.subr.bf16.mxu0 %v661
    %894 = vmatpush1.bf16.msra.mxu0 %v660
    %895 = vmatprep.subr.bf16.mxu0 %v663
    %896 = vmatpush1.bf16.msra.mxu0 %v662
    %897 = vmatprep.subr.bf16.mxu0 %v665
    %898 = vmatpush1.bf16.msra.mxu0 %v664
    %899 = vmatprep.subr.bf16.mxu0 %v667
    %900 = vmatpush1.bf16.msra.mxu0 %v666
    %901 = vmatprep.subr.bf16.mxu0 %v669
    %902 = vmatpush1.bf16.msra.mxu0 %v668
    %903 = vmatprep.subr.bf16.mxu0 %v671
    %904 = vmatpush1.bf16.msra.mxu0 %v670
    %905 = vmatprep.subr.bf16.mxu0 %v673
    %906 = vmatpush1.bf16.msra.mxu0 %v672
    %907 = vmatprep.mubr.bf16.mxu0 %v263
    %908 = vmatmul.mubr.bf16.gmra.mrb[0].mxu0 %v262
    %v909 = vpop.f32.mrb[0].mxu0
    %v910 = vadd.f32 %v869, %v909
    %v911 = vpop.f32.mrb[0].mxu0
    %v912 = vadd.f32 %v871, %v911
    %v913 = vpop.f32.mrb[0].mxu0
    %v914 = vpop.f32.mrb[0].mxu0
    %915 = vdwg.mxu0
    %916 = vmatprep.subr.bf16.mxu0 %v675
    %917 = vmatpush1.bf16.msra.mxu0 %v674
    %918 = vmatprep.subr.bf16.mxu0 %v677
    %919 = vmatpush1.bf16.msra.mxu0 %v676
    %920 = vmatprep.subr.bf16.mxu0 %v679
    %921 = vmatpush1.bf16.msra.mxu0 %v678
    %922 = vmatprep.subr.bf16.mxu0 %v681
    %923 = vmatpush1.bf16.msra.mxu0 %v680
    %924 = vmatprep.subr.bf16.mxu0 %v683
    %925 = vmatpush1.bf16.msra.mxu0 %v682
    %926 = vmatprep.subr.bf16.mxu0 %v685
    %927 = vmatpush1.bf16.msra.mxu0 %v684
    %928 = vmatprep.subr.bf16.mxu0 %v687
    %929 = vmatpush1.bf16.msra.mxu0 %v686
    %930 = vmatprep.subr.bf16.mxu0 %v689
    %931 = vmatpush1.bf16.msra.mxu0 %v688
    %932 = vmatprep.subr.bf16.mxu0 %v691
    %933 = vmatpush1.bf16.msra.mxu0 %v690
    %934 = vmatprep.subr.bf16.mxu0 %v693
    %935 = vmatpush1.bf16.msra.mxu0 %v692
    %936 = vmatprep.subr.bf16.mxu0 %v695
    %937 = vmatpush1.bf16.msra.mxu0 %v694
    %938 = vmatprep.subr.bf16.mxu0 %v697
    %939 = vmatpush1.bf16.msra.mxu0 %v696
    %940 = vmatprep.subr.bf16.mxu0 %v699
    %941 = vmatpush1.bf16.msra.mxu0 %v698
    %942 = vmatprep.subr.bf16.mxu0 %v701
    %943 = vmatpush1.bf16.msra.mxu0 %v700
    %944 = vmatprep.subr.bf16.mxu0 %v703
    %945 = vmatpush1.bf16.msra.mxu0 %v702
    %946 = vmatprep.subr.bf16.mxu0 %v705
    %947 = vmatpush1.bf16.msra.mxu0 %v704
    %948 = vmatprep.mubr.bf16.mxu0 %v265
    %949 = vmatmul.mubr.bf16.gmra.mrb[0].mxu0 %v264
    %v950 = vpop.f32.mrb[0].mxu0
    %v951 = vadd.f32 %v910, %v950
    %v952 = vpop.f32.mrb[0].mxu0
    %v953 = vadd.f32 %v912, %v952
    %v954 = vpop.f32.mrb[0].mxu0
    %v955 = vpop.f32.mrb[0].mxu0
    %956 = vdwg.mxu0
    %957 = vmatprep.subr.bf16.mxu0 %v707
    %958 = vmatpush1.bf16.msra.mxu0 %v706
    %959 = vmatprep.subr.bf16.mxu0 %v709
    %960 = vmatpush1.bf16.msra.mxu0 %v708
    %961 = vmatprep.subr.bf16.mxu0 %v711
    %962 = vmatpush1.bf16.msra.mxu0 %v710
    %963 = vmatprep.subr.bf16.mxu0 %v713
    %964 = vmatpush1.bf16.msra.mxu0 %v712
    %965 = vmatprep.subr.bf16.mxu0 %v715
    %966 = vmatpush1.bf16.msra.mxu0 %v714
    %967 = vmatprep.subr.bf16.mxu0 %v717
    %968 = vmatpush1.bf16.msra.mxu0 %v716
    %969 = vmatprep.subr.bf16.mxu0 %v719
    %970 = vmatpush1.bf16.msra.mxu0 %v718
    %971 = vmatprep.subr.bf16.mxu0 %v721
    %972 = vmatpush1.bf16.msra.mxu0 %v720
    %973 = vmatprep.subr.bf16.mxu0 0
    %974 = vmatpush1.bf16.msra.mxu0 0
    %975 = vmatprep.subr.bf16.mxu0 0
    %976 = vmatpush1.bf16.msra.mxu0 0
    %977 = vmatprep.subr.bf16.mxu0 0
    %978 = vmatpush1.bf16.msra.mxu0 0
    %979 = vmatprep.subr.bf16.mxu0 0
    %980 = vmatpush1.bf16.msra.mxu0 0
    %981 = vmatprep.subr.bf16.mxu0 0
    %982 = vmatpush1.bf16.msra.mxu0 0
    %983 = vmatprep.subr.bf16.mxu0 0
    %984 = vmatpush1.bf16.msra.mxu0 0
    %985 = vmatprep.subr.bf16.mxu0 0
    %986 = vmatpush1.bf16.msra.mxu0 0
    %987 = vmatprep.subr.bf16.mxu0 0
    %988 = vmatpush1.bf16.msra.mxu0 0
    %989 = vmatprep.mubr.bf16.mxu0 0
    %990 = vmatmul.mubr.bf16.gmra.mrb[0].mxu0 %v266
    %v991 = vpop.f32.mrb[0].mxu0
    %v992 = vadd.f32 %v951, %v991
    %v993 = vpop.f32.mrb[0].mxu0
    %v994 = vadd.f32 %v953, %v993
    %v995 = vpop.f32.mrb[0].mxu0
    %v996 = vpop.f32.mrb[0].mxu0
    %997 = vdwg.mxu0
    %v998 = vmax.f32 %v992, 0.0
    %v999 = vmax.f32 %v994, 0.0
    %v1000 = vpack.c.bf16 %v998, %v998
    %v1001 = vpack.c.bf16 %v999, %v999
    %v1002 = vld [vmem:[%s3] sm:$0xf]
    %v1003 = vld [vmem:[%s3 + $0x4] sm:$0xf]
    %v1004 = vld [vmem:[%s3 + $0x8] sm:$0xf]
    %v1005 = vld [vmem:[%s3 + $0xc] sm:$0xf]
    %v1006 = vld [vmem:[%s3 + $0x10] sm:$0xf]
    %v1007 = vld [vmem:[%s3 + $0x14] sm:$0xf]
    %v1008 = vld [vmem:[%s3 + $0x18] sm:$0xf]
    %v1009 = vld [vmem:[%s3 + $0x1c] sm:$0xf]
    %v1010 = vld [vmem:[%s3 + $0x20] sm:$0xf]
    %v1011 = vld [vmem:[%s3 + $0x24] sm:$0xf]
    %v1012 = vld [vmem:[%s3 + $0x28] sm:$0xf]
    %v1013 = vld [vmem:[%s3 + $0x2c] sm:$0xf]
    %v1014 = vld [vmem:[%s3 + $0x30] sm:$0xf]
    %v1015 = vld [vmem:[%s3 + $0x34] sm:$0xf]
    %v1016 = vld [vmem:[%s3 + $0x38] sm:$0xf]
    %v1017 = vld [vmem:[%s3 + $0x3c] sm:$0xf]
    %v1018 = vld [vmem:[%s3 + $0x40] sm:$0xf]
    %v1019 = vld [vmem:[%s3 + $0x44] sm:$0xf]
    %v1020 = vld [vmem:[%s3 + $0x48] sm:$0xf]
    %v1021 = vld [vmem:[%s3 + $0x4c] sm:$0xf]
    %v1022 = vld [vmem:[%s3 + $0x50] sm:$0xf]
    %v1023 = vld [vmem:[%s3 + $0x54] sm:$0xf]
    %v1024 = vld [vmem:[%s3 + $0x58] sm:$0xf]
    %v1025 = vld [vmem:[%s3 + $0x5c] sm:$0xf]
    %v1026 = vld [vmem:[%s3 + $0x60] sm:$0xf]
    %v1027 = vld [vmem:[%s3 + $0x64] sm:$0xf]
    %v1028 = vld [vmem:[%s3 + $0x68] sm:$0xf]
    %v1029 = vld [vmem:[%s3 + $0x6c] sm:$0xf]
    %v1030 = vld [vmem:[%s3 + $0x70] sm:$0xf]
    %v1031 = vld [vmem:[%s3 + $0x74] sm:$0xf]
    %v1032 = vld [vmem:[%s3 + $0x78] sm:$0xf]
    %v1033 = vld [vmem:[%s3 + $0x7c] sm:$0xf]
    %v1034 = vld [vmem:[#allocation8] sm:$0x1]
    %v1036 = vlaneseq
    %v1037 = vshrl.u32 %v1036, 7
    %v1038 = vsub.s32 0, %v1037
    %v1039 = vrot.slane %v1034, %v1038
    %v1073 = vunpack.c.l.b16 %v1002
    %v1074 = vunpack.c.l.b16 %v1003
    %v1075 = vunpack.c.l.b16 %v1004
    %v1076 = vunpack.c.l.b16 %v1005
    %v1077 = vunpack.c.l.b16 %v1006
    %v1078 = vunpack.c.l.b16 %v1007
    %v1079 = vunpack.c.l.b16 %v1008
    %v1080 = vunpack.c.l.b16 %v1009
    %v1081 = vunpack.c.l.b16 %v1010
    %v1082 = vunpack.c.l.b16 %v1011
    %v1083 = vunpack.c.l.b16 %v1012
    %v1084 = vunpack.c.l.b16 %v1013
    %v1085 = vunpack.c.l.b16 %v1014
    %v1086 = vunpack.c.l.b16 %v1015
    %v1087 = vunpack.c.l.b16 %v1016
    %v1088 = vunpack.c.l.b16 %v1017
    %v1089 = vunpack.c.l.b16 %v1018
    %v1090 = vunpack.c.l.b16 %v1019
    %v1091 = vunpack.c.l.b16 %v1020
    %v1092 = vunpack.c.l.b16 %v1021
    %v1093 = vunpack.c.l.b16 %v1022
    %v1094 = vunpack.c.l.b16 %v1023
    %v1095 = vunpack.c.l.b16 %v1024
    %v1096 = vunpack.c.l.b16 %v1025
    %v1097 = vunpack.c.l.b16 %v1026
    %v1098 = vunpack.c.l.b16 %v1027
    %v1099 = vunpack.c.l.b16 %v1028
    %v1100 = vunpack.c.l.b16 %v1029
    %v1101 = vunpack.c.l.b16 %v1030
    %v1102 = vunpack.c.l.b16 %v1031
    %v1103 = vunpack.c.l.b16 %v1032
    %v1104 = vunpack.c.l.b16 %v1033
    %v1105 = vpack.c.b16 %v1074, %v1073
    %v1106 = vpack.c.b16 %v1076, %v1075
    %v1107 = vpack.c.b16 %v1078, %v1077
    %v1108 = vpack.c.b16 %v1080, %v1079
    %v1109 = vpack.c.b16 %v1082, %v1081
    %v1110 = vpack.c.b16 %v1084, %v1083
    %v1111 = vpack.c.b16 %v1086, %v1085
    %v1112 = vpack.c.b16 %v1088, %v1087
    %v1113 = vpack.c.b16 %v1090, %v1089
    %v1114 = vpack.c.b16 %v1092, %v1091
    %v1115 = vpack.c.b16 %v1094, %v1093
    %v1116 = vpack.c.b16 %v1096, %v1095
    %v1117 = vpack.c.b16 %v1098, %v1097
    %v1118 = vpack.c.b16 %v1100, %v1099
    %v1119 = vpack.c.b16 %v1102, %v1101
    %v1120 = vpack.c.b16 %v1104, %v1103
    %1137 = vmatprep.subr.bf16.mxu0 0
    %1138 = vmatpush1.bf16.msra.mxu0 %v1105
    %1139 = vmatprep.subr.bf16.mxu0 0
    %1140 = vmatpush1.bf16.msra.mxu0 %v1106
    %1141 = vmatprep.subr.bf16.mxu0 0
    %1142 = vmatpush1.bf16.msra.mxu0 %v1107
    %1143 = vmatprep.subr.bf16.mxu0 0
    %1144 = vmatpush1.bf16.msra.mxu0 %v1108
    %1145 = vmatprep.subr.bf16.mxu0 0
    %1146 = vmatpush1.bf16.msra.mxu0 %v1109
    %1147 = vmatprep.subr.bf16.mxu0 0
    %1148 = vmatpush1.bf16.msra.mxu0 %v1110
    %1149 = vmatprep.subr.bf16.mxu0 0
    %1150 = vmatpush1.bf16.msra.mxu0 %v1111
    %1151 = vmatprep.subr.bf16.mxu0 0
    %1152 = vmatpush1.bf16.msra.mxu0 %v1112
    %1153 = vmatprep.subr.bf16.mxu0 0
    %1154 = vmatpush1.bf16.msra.mxu0 %v1113
    %1155 = vmatprep.subr.bf16.mxu0 0
    %1156 = vmatpush1.bf16.msra.mxu0 %v1114
    %1157 = vmatprep.subr.bf16.mxu0 0
    %1158 = vmatpush1.bf16.msra.mxu0 %v1115
    %1159 = vmatprep.subr.bf16.mxu0 0
    %1160 = vmatpush1.bf16.msra.mxu0 %v1116
    %1161 = vmatprep.subr.bf16.mxu0 0
    %1162 = vmatpush1.bf16.msra.mxu0 %v1117
    %1163 = vmatprep.subr.bf16.mxu0 0
    %1164 = vmatpush1.bf16.msra.mxu0 %v1118
    %1165 = vmatprep.subr.bf16.mxu0 0
    %1166 = vmatpush1.bf16.msra.mxu0 %v1119
    %1167 = vmatprep.subr.bf16.mxu0 0
    %1168 = vmatpush1.bf16.msra.mxu0 %v1120
    %1169 = vmatprep.mubr.bf16.mxu0 %v1001
    %1170 = vmatmul.mubr.bf16.gmra.mrb[0].mxu0 %v1000
    %v1171 = vpop.f32.mrb[0].mxu0
    %v1172 = vadd.f32 %v1039, %v1171
    %v1173 = vpop.f32.mrb[0].mxu0
    %v1174 = vpop.f32.mrb[0].mxu0
    %v1175 = vpop.f32.mrb[0].mxu0
    %1176 = vdwg.mxu0
    %v1177 = vmax.f32 %v1172, 0.0
    %v1178 = vpack.c.bf16 %v1177, %v1177
    %v1179 = vld [vmem:[%s5] sm:$0xf]
    %v1180 = vld [vmem:[%s5 + $0x4] sm:$0xf]
    %v1181 = vld [vmem:[%s5 + $0x8] sm:$0xf]
    %v1182 = vld [vmem:[%s5 + $0xc] sm:$0xf]
    %v1183 = vld [vmem:[%s5 + $0x10] sm:$0xf]
    %v1184 = vld [vmem:[%s5 + $0x14] sm:$0xf]
    %v1185 = vld [vmem:[%s5 + $0x18] sm:$0xf]
    %v1186 = vld [vmem:[%s5 + $0x1c] sm:$0xf]
    %v1187 = vld [vmem:[%s5 + $0x20] sm:$0xf]
    %v1188 = vld [vmem:[%s5 + $0x24] sm:$0xf]
    %v1189 = vld [vmem:[%s5 + $0x28] sm:$0xf]
    %v1190 = vld [vmem:[%s5 + $0x2c] sm:$0xf]
    %v1191 = vld [vmem:[%s5 + $0x30] sm:$0xf]
    %v1192 = vld [vmem:[%s5 + $0x34] sm:$0xf]
    %v1193 = vld [vmem:[%s5 + $0x38] sm:$0xf]
    %v1194 = vld [vmem:[%s5 + $0x3c] sm:$0xf]
    %v1195 = vld [vmem:[%s6] sm:$0x1]
    %v1197 = vlaneseq
    %v1198 = vshrl.u32 %v1197, 7
    %v1199 = vsub.s32 0, %v1198
    %v1200 = vrot.slane %v1195, %v1199
    %v1218 = vunpack.c.l.b16 %v1179
    %v1219 = vunpack.c.l.b16 %v1180
    %v1220 = vunpack.c.l.b16 %v1181
    %v1221 = vunpack.c.l.b16 %v1182
    %v1222 = vunpack.c.l.b16 %v1183
    %v1223 = vunpack.c.l.b16 %v1184
    %v1224 = vunpack.c.l.b16 %v1185
    %v1225 = vunpack.c.l.b16 %v1186
    %v1226 = vunpack.c.l.b16 %v1187
    %v1227 = vunpack.c.l.b16 %v1188
    %v1228 = vunpack.c.l.b16 %v1189
    %v1229 = vunpack.c.l.b16 %v1190
    %v1230 = vunpack.c.l.b16 %v1191
    %v1231 = vunpack.c.l.b16 %v1192
    %v1232 = vunpack.c.l.b16 %v1193
    %v1233 = vunpack.c.l.b16 %v1194
    %v1234 = vpack.c.b16 %v1219, %v1218
    %v1235 = vpack.c.b16 %v1221, %v1220
    %v1236 = vpack.c.b16 %v1223, %v1222
    %v1237 = vpack.c.b16 %v1225, %v1224
    %v1238 = vpack.c.b16 %v1227, %v1226
    %v1239 = vpack.c.b16 %v1229, %v1228
    %v1240 = vpack.c.b16 %v1231, %v1230
    %v1241 = vpack.c.b16 %v1233, %v1232
    %1250 = vmatprep.subr.bf16.mxu0 0
    %1251 = vmatpush1.bf16.msra.mxu0 %v1234
    %1252 = vmatprep.subr.bf16.mxu0 0
    %1253 = vmatpush1.bf16.msra.mxu0 %v1235
    %1254 = vmatprep.subr.bf16.mxu0 0
    %1255 = vmatpush1.bf16.msra.mxu0 %v1236
    %1256 = vmatprep.subr.bf16.mxu0 0
    %1257 = vmatpush1.bf16.msra.mxu0 %v1237
    %1258 = vmatprep.subr.bf16.mxu0 0
    %1259 = vmatpush1.bf16.msra.mxu0 %v1238
    %1260 = vmatprep.subr.bf16.mxu0 0
    %1261 = vmatpush1.bf16.msra.mxu0 %v1239
    %1262 = vmatprep.subr.bf16.mxu0 0
    %1263 = vmatpush1.bf16.msra.mxu0 %v1240
    %1264 = vmatprep.subr.bf16.mxu0 0
    %1265 = vmatpush1.bf16.msra.mxu0 %v1241
    %1266 = vmatprep.subr.bf16.mxu0 0
    %1267 = vmatpush1.bf16.msra.mxu0 0
    %1268 = vmatprep.subr.bf16.mxu0 0
    %1269 = vmatpush1.bf16.msra.mxu0 0
    %1270 = vmatprep.subr.bf16.mxu0 0
    %1271 = vmatpush1.bf16.msra.mxu0 0
    %1272 = vmatprep.subr.bf16.mxu0 0
    %1273 = vmatpush1.bf16.msra.mxu0 0
    %1274 = vmatprep.subr.bf16.mxu0 0
    %1275 = vmatpush1.bf16.msra.mxu0 0
    %1276 = vmatprep.subr.bf16.mxu0 0
    %1277 = vmatpush1.bf16.msra.mxu0 0
    %1278 = vmatprep.subr.bf16.mxu0 0
    %1279 = vmatpush1.bf16.msra.mxu0 0
    %1280 = vmatprep.subr.bf16.mxu0 0
    %1281 = vmatpush1.bf16.msra.mxu0 0
    %1282 = vmatprep.mubr.bf16.mxu0 0
    %1283 = vmatmul.mubr.bf16.gmra.mrb[0].mxu0 %v1178
    %v1284 = vpop.f32.mrb[0].mxu0
    %v1285 = vadd.f32 %v1200, %v1284
    %v1286 = vpop.f32.mrb[0].mxu0
    %v1287 = vpop.f32.mrb[0].mxu0
    %v1288 = vpop.f32.mrb[0].mxu0
    %1289 = vdwg.mxu0
    %v1290 = vmax.f32 %v1285, 0.0
    %v1291 = vpack.c.bf16 %v1290, %v1290
    %v1292 = vld [vmem:[%s7] sm:$0xf]
    %v1293 = vld [vmem:[%s7 + $0x4] sm:$0xf]
    %v1294 = vld [vmem:[%s7 + $0x8] sm:$0xf]
    %v1295 = vld [vmem:[%s7 + $0xc] sm:$0xf]
    %v1296 = vld [vmem:[%s7 + $0x10] sm:$0xf]
    %v1297 = vld [vmem:[%s7 + $0x14] sm:$0xf]
    %v1298 = vld [vmem:[%s7 + $0x18] sm:$0xf]
    %v1299 = vld [vmem:[%s7 + $0x1c] sm:$0xf]
    %v1300 = vld [vmem:[%s8] sm:$0x1]
    %v1302 = vlaneseq
    %v1303 = vshrl.u32 %v1302, 7
    %v1304 = vsub.s32 0, %v1303
    %v1305 = vrot.slane %v1300, %v1304
    %v1315 = vunpack.c.l.b16 %v1292
    %v1316 = vunpack.c.l.b16 %v1293
    %v1317 = vunpack.c.l.b16 %v1294
    %v1318 = vunpack.c.l.b16 %v1295
    %v1319 = vunpack.c.l.b16 %v1296
    %v1320 = vunpack.c.l.b16 %v1297
    %v1321 = vunpack.c.l.b16 %v1298
    %v1322 = vunpack.c.l.b16 %v1299
    %v1323 = vpack.c.b16 %v1316, %v1315
    %v1324 = vpack.c.b16 %v1318, %v1317
    %v1325 = vpack.c.b16 %v1320, %v1319
    %v1326 = vpack.c.b16 %v1322, %v1321
    %vm1331 = vcmask 523264
    %v1333 = vsel %vm1331, %v1291, 0
    %1335 = vmatprep.subr.bf16.mxu0 0
    %1336 = vmatpush1.bf16.msra.mxu0 %v1323
    %1337 = vmatprep.subr.bf16.mxu0 0
    %1338 = vmatpush1.bf16.msra.mxu0 %v1324
    %1339 = vmatprep.subr.bf16.mxu0 0
    %1340 = vmatpush1.bf16.msra.mxu0 %v1325
    %1341 = vmatprep.subr.bf16.mxu0 0
    %1342 = vmatpush1.bf16.msra.mxu0 %v1326
    %1343 = vmatprep.subr.bf16.mxu0 0
    %1344 = vmatpush1.bf16.msra.mxu0 0
    %1345 = vmatprep.subr.bf16.mxu0 0
    %1346 = vmatpush1.bf16.msra.mxu0 0
    %1347 = vmatprep.subr.bf16.mxu0 0
    %1348 = vmatpush1.bf16.msra.mxu0 0
    %1349 = vmatprep.subr.bf16.mxu0 0
    %1350 = vmatpush1.bf16.msra.mxu0 0
    %1351 = vmatprep.subr.bf16.mxu0 0
    %1352 = vmatpush1.bf16.msra.mxu0 0
    %1353 = vmatprep.subr.bf16.mxu0 0
    %1354 = vmatpush1.bf16.msra.mxu0 0
    %1355 = vmatprep.subr.bf16.mxu0 0
    %1356 = vmatpush1.bf16.msra.mxu0 0
    %1357 = vmatprep.subr.bf16.mxu0 0
    %1358 = vmatpush1.bf16.msra.mxu0 0
    %1359 = vmatprep.subr.bf16.mxu0 0
    %1360 = vmatpush1.bf16.msra.mxu0 0
    %1361 = vmatprep.subr.bf16.mxu0 0
    %1362 = vmatpush1.bf16.msra.mxu0 0
    %1363 = vmatprep.subr.bf16.mxu0 0
    %1364 = vmatpush1.bf16.msra.mxu0 0
    %1365 = vmatprep.subr.bf16.mxu0 0
    %1366 = vmatpush1.bf16.msra.mxu0 0
    %1367 = vmatprep.mubr.bf16.mxu0 0
    %1368 = vmatmul.mubr.bf16.gmra.mrb[0].mxu0 %v1333
    %v1369 = vpop.f32.mrb[0].mxu0
    %v1370 = vadd.f32 %v1305, %v1369
    %v1371 = vpop.f32.mrb[0].mxu0
    %v1372 = vpop.f32.mrb[0].mxu0
    %v1373 = vpop.f32.mrb[0].mxu0
    %1374 = vdwg.mxu0
    %v1375 = vmax.f32 %v1370, 0.0
    %v1376 = vld [vmem:[%s9] sm:$0x1]
    %v1378 = vlaneseq
    %v1379 = vshrl.u32 %v1378, 7
    %v1380 = vsub.s32 0, %v1379
    %v1381 = vrot.slane %v1376, %v1380
    %v1383 = vmul.f32 %v1375, %v1381
    %vm1384 = vcmask 261120
    %v1385 = vsel %vm1384, %v1383, 0.0
    %1386 = vadd.xlane.f32.xlu0 %v1385
    %v1387 = vpop.xlane.xlu0 %1386
    %v1388 = vld [vmem:[#allocation3] sm:$0x1]
    %v1390 = vlaneseq
    %v1391 = vshrl.u32 %v1390, 7
    %v1392 = vsub.s32 0, %v1391
    %v1393 = vrot.slane %v1388, %v1392
    %v1395 = vadd.f32 %v1387, %v1393
    %vm1396 = vcmask 7168
    %1397 = vst.msk [vmem:[%s11] sm:$0xff] %vm1396, %v1395
    // Predicated region
    $region58: #{chess_model_forward.1} parent=1 // pred_check
      _
    $region59: #{chess_model_forward.1} parent=1 // pred_check_branch
      %1399 = sbr.rel (0) target = $region61
    $region60: #{chess_model_forward.1} parent=1 // pred_region
      _
    $region61: #{chess_model_forward.1} parent=1 // pred_fallthru
      _
    // Predicated region
    $region62: #{chess_model_forward.1} parent=1 // pred_check
      _
    $region63: #{chess_model_forward.1} parent=1 // pred_check_branch
      %1401 = sbr.rel (0) target = $region65
    $region64: #{chess_model_forward.1} parent=1 // pred_region
      _
    $region65: #{chess_model_forward.1} parent=1 // pred_fallthru
      _
    %1402 = vsyncpa [#allocation5], 1
    %1403 = vsyncpa [#allocation7], 1

</llo_original>
